<compile_context>
chip_gen: v5e
topology: v5e:2x2
jax: 0.10.0
libtpu: 0.0.40
codegen_flags: <defaults>
</compile_context>

<pallas_src>
import jax
import jax.numpy as jnp
from jax.experimental import pallas as pl
from jax.experimental.pallas import tpu as pltpu

# TODO(synk): BertModel('bert-base-uncased') and torchvision resnet18 backbones
# are not translated; their [B,768] CLS embedding and [B,1000] logits are taken
# as kernel inputs.

T_IN = 768         # bert hidden size (6*128)
I_IN = 1000        # resnet18 logits
I_IN_PAD = 1024    # 1000 -> padded to 8*128 (zero-padded lanes)
HID = 128          # t_linear / i_linear output size
FC_OUT = 3
OUT_PAD = 128      # fc output 3 -> padded to one full lane group

TM_TARGET = 512    # batch-tile target (sweet spot of the HBM roofline sweep)


def _round_up(x, m):
    return ((x + m - 1) // m) * m


def _choose_tile(B):
    """Adaptive batch tile.

    Big enough to amortize per-grid-step overhead, small enough that
    (a) zero-row padding is bounded to < 8 rows per tile, and
    (b) the grid has >= 2 steps for large B so the 'parallel' axis can be
        sharded across both v7x TensorCores.
    """
    n_tiles = max(1, -(-B // TM_TARGET))         # cdiv(B, TM_TARGET)
    if B > 256:                                  # enough rows to split across 2 TCs
        n_tiles = max(n_tiles, 2)
    TM = _round_up(max(-(-B // n_tiles), 8), 8)  # cdiv(B, n_tiles), 8-aligned
    return TM, TM * n_tiles


# -----------------------------------------------------------------------------
# Fused head kernel (one batch tile per grid step; weights VMEM-resident).
# All matmuls are bf16 x bf16 on the MXU; accumulation / biases / output are f32.
# -----------------------------------------------------------------------------
def head_kernel(txt_ref, img_ref,
                wt_ref, bt_ref,
                wi_ref, bi_ref,
                wf_t_ref, wf_i_ref, bf_ref,
                out_ref):
    t = jnp.dot(txt_ref[...], wt_ref[...], preferred_element_type=jnp.float32)
    t = jnp.maximum(t + bt_ref[...], 0.0)

    i = jnp.dot(img_ref[...], wi_ref[...], preferred_element_type=jnp.float32)
    i = jnp.maximum(i + bi_ref[...], 0.0)

    # fc over concat([t, i]) == t @ Wf_top + i @ Wf_bot + bf
    y = (jnp.dot(t.astype(jnp.bfloat16), wf_t_ref[...],
                 preferred_element_type=jnp.float32)
         + jnp.dot(i.astype(jnp.bfloat16), wf_i_ref[...],
                   preferred_element_type=jnp.float32)
         + bf_ref[...])
    out_ref[...] = y


@jax.jit
def simple_model_head(txt_cls, img_feat, params):
    """txt_cls: [B, 768] f32, img_feat: [B, 1000] f32 -> [B, 3] f32."""
    B = txt_cls.shape[0]
    TM, B_pad = _choose_tile(B)
    pad_rows = B_pad - B

    # One fused cast(+pad) pass per activation: bf16 halves the kernel's
    # dominant input DMA traffic; XLA fuses convert+pad into a single op.
    txt_p = txt_cls.astype(jnp.bfloat16)
    if pad_rows:
        txt_p = jnp.pad(txt_p, ((0, pad_rows), (0, 0)))
    img_p = jnp.pad(img_feat.astype(jnp.bfloat16),
                    ((0, pad_rows), (0, I_IN_PAD - I_IN)))

    act_map = lambda m: (m, 0)   # batch-tiled operands
    w_map = lambda m: (0, 0)     # weights: same block every step -> VMEM-resident

    out = pl.pallas_call(
        head_kernel,
        grid=(B_pad // TM,),
        out_shape=jax.ShapeDtypeStruct((B_pad, OUT_PAD), jnp.float32),
        in_specs=[
            pl.BlockSpec((TM, T_IN), act_map),      # txt  (bf16)
            pl.BlockSpec((TM, I_IN_PAD), act_map),  # img  (bf16)
            pl.BlockSpec((T_IN, HID), w_map),       # wt   (bf16)
            pl.BlockSpec((1, HID), w_map),          # bt   (f32)
            pl.BlockSpec((I_IN_PAD, HID), w_map),   # wi   (bf16)
            pl.BlockSpec((1, HID), w_map),          # bi   (f32)
            pl.BlockSpec((HID, OUT_PAD), w_map),    # wf_t (bf16)
            pl.BlockSpec((HID, OUT_PAD), w_map),    # wf_i (bf16)
            pl.BlockSpec((1, OUT_PAD), w_map),      # bf   (f32)
        ],
        out_specs=pl.BlockSpec((TM, OUT_PAD), act_map),
        compiler_params=pltpu.CompilerParams(
            dimension_semantics=("parallel",)),
    )(txt_p, img_p,
      params["wt"], params["bt"],
      params["wi"], params["bi"],
      params["wf_t"], params["wf_i"], params["bf"])

    return out[:B, :FC_OUT]


# -----------------------------------------------------------------------------
# Deterministic parameter init (shapes from simpleModel.__init__).
# Matmul weights are stored in bf16; biases stay f32.
# -----------------------------------------------------------------------------
def init_params(key):
    ks = jax.random.split(key, 6)

    def uniform(k, shape, fan_in):
        bound = 1.0 / jnp.sqrt(jnp.float32(fan_in))
        return jax.random.uniform(k, shape, jnp.float32, -bound, bound)

    # t_linear: 768 -> 128   (stored as [in, out])
    wt = uniform(ks[0], (T_IN, HID), T_IN)
    bt = uniform(ks[1], (1, HID), T_IN)

    # i_linear: 1000 -> 128, input dim zero-padded to 1024
    wi = jnp.zeros((I_IN_PAD, HID), jnp.float32).at[:I_IN, :].set(
        uniform(ks[2], (I_IN, HID), I_IN))
    bi = uniform(ks[3], (1, HID), I_IN)

    # fc: 256 -> 3, split into txt / img halves, output dim zero-padded to 128.
    wf_raw = uniform(ks[4], (2 * HID, FC_OUT), 2 * HID)
    bf_raw = uniform(ks[5], (1, FC_OUT), 2 * HID)
    wf_t = jnp.zeros((HID, OUT_PAD), jnp.float32).at[:, :FC_OUT].set(wf_raw[:HID])
    wf_i = jnp.zeros((HID, OUT_PAD), jnp.float32).at[:, :FC_OUT].set(wf_raw[HID:])
    bf = jnp.zeros((1, OUT_PAD), jnp.float32).at[:, :FC_OUT].set(bf_raw)

    return {"wt": wt.astype(jnp.bfloat16), "bt": bt,
            "wi": wi.astype(jnp.bfloat16), "bi": bi,
            "wf_t": wf_t.astype(jnp.bfloat16),
            "wf_i": wf_i.astype(jnp.bfloat16),
            "bf": bf}


# -----------------------------------------------------------------------------
# Pure-JAX reference mirroring the kernel's precision policy
# (bf16-rounded activations/weights, f32 accumulation) for correctness checks.
# -----------------------------------------------------------------------------
def ref_head(txt_cls, img_feat, params):
    txt = txt_cls.astype(jnp.bfloat16).astype(jnp.float32)
    img = jnp.pad(img_feat.astype(jnp.bfloat16).astype(jnp.float32),
                  ((0, 0), (0, I_IN_PAD - I_IN)))
    wt = params["wt"].astype(jnp.float32)
    wi = params["wi"].astype(jnp.float32)
    wf_t = params["wf_t"].astype(jnp.float32)
    wf_i = params["wf_i"].astype(jnp.float32)

    t = jnp.maximum(txt @ wt + params["bt"], 0.0)
    i = jnp.maximum(img @ wi + params["bi"], 0.0)
    t = t.astype(jnp.bfloat16).astype(jnp.float32)
    i = i.astype(jnp.bfloat16).astype(jnp.float32)
    y = t @ wf_t + i @ wf_i + params["bf"]
    return y[:, :FC_OUT]


if __name__ == "__main__":
    params = init_params(jax.random.PRNGKey(1))
    key = jax.random.PRNGKey(0)

    # B=2: small-batch single-tile path.  B=160: single adaptive tile with zero
    # row padding (was padded to 256 before).  B=600: multi-tile grid path
    # (2 tiles of 304 rows; exercises the >=2-step megacore split).
    for B in (2, 160, 600):
        k_txt, k_img = jax.random.split(jax.random.fold_in(key, B))
        txt_cls = jax.random.normal(k_txt, (B, T_IN), jnp.float32)   # BERT CLS
        img_feat = jax.random.normal(k_img, (B, I_IN), jnp.float32)  # ResNet18 logits

        out = simple_model_head(txt_cls, img_feat, params)
        jax.block_until_ready(out)

        assert out.shape == (B, FC_OUT), out.shape
        ref = ref_head(txt_cls, img_feat, params)
        assert jnp.allclose(out, ref, atol=1e-2, rtol=1e-2), \
            float(jnp.max(jnp.abs(out - ref)))

    print("KERNEL_OK")
</pallas_src>

<mosaic_0001>
module attributes {stable_mosaic.version = 11 : i64} {
  func.func @head_kernel(%arg0: i32, %arg1: memref<8x768xbf16, #tpu.memory_space<vmem>>, %arg2: memref<8x1024xbf16, #tpu.memory_space<vmem>>, %arg3: memref<768x128xbf16, #tpu.memory_space<vmem>>, %arg4: memref<1x128xf32, #tpu.memory_space<vmem>>, %arg5: memref<1024x128xbf16, #tpu.memory_space<vmem>>, %arg6: memref<1x128xf32, #tpu.memory_space<vmem>>, %arg7: memref<128x128xbf16, #tpu.memory_space<vmem>>, %arg8: memref<128x128xbf16, #tpu.memory_space<vmem>>, %arg9: memref<1x128xf32, #tpu.memory_space<vmem>>, %arg10: memref<8x128xf32, #tpu.memory_space<vmem>>) attributes {dimension_semantics = [#tpu.dimension_semantics<parallel>], iteration_bounds = array<i64: 1>, scalar_prefetch = 0 : i64, scratch_operands = 0 : i64, tpu.core_type = #tpu.core_type<tc>, window_params = [{transform_indices = @transform_0, window_bounds = array<i64: 8, 768>}, {transform_indices = @transform_1, window_bounds = array<i64: 8, 1024>}, {pipeline_mode = #tpu.pipeline_mode<synchronous>, transform_indices = @transform_2, window_bounds = array<i64: 768, 128>}, {pipeline_mode = #tpu.pipeline_mode<synchronous>, transform_indices = @transform_3, window_bounds = array<i64: 1, 128>}, {pipeline_mode = #tpu.pipeline_mode<synchronous>, transform_indices = @transform_4, window_bounds = array<i64: 1024, 128>}, {pipeline_mode = #tpu.pipeline_mode<synchronous>, transform_indices = @transform_5, window_bounds = array<i64: 1, 128>}, {pipeline_mode = #tpu.pipeline_mode<synchronous>, transform_indices = @transform_6, window_bounds = array<i64: 128, 128>}, {pipeline_mode = #tpu.pipeline_mode<synchronous>, transform_indices = @transform_7, window_bounds = array<i64: 128, 128>}, {pipeline_mode = #tpu.pipeline_mode<synchronous>, transform_indices = @transform_8, window_bounds = array<i64: 1, 128>}, {transform_indices = @transform_9, window_bounds = array<i64: 8, 128>}]} {
    %c0 = arith.constant 0 : index
    %c0_0 = arith.constant 0 : index
    %0 = vector.load %arg1[%c0, %c0_0] : memref<8x768xbf16, #tpu.memory_space<vmem>>, vector<8x768xbf16>
    %c0_1 = arith.constant 0 : index
    %c0_2 = arith.constant 0 : index
    %1 = vector.load %arg3[%c0_1, %c0_2] : memref<768x128xbf16, #tpu.memory_space<vmem>>, vector<768x128xbf16>
    %cst = arith.constant dense<0.000000e+00> : vector<8x128xf32>
    %2 = tpu.matmul %0, %1, %cst {dimension_numbers = #tpu.dot_dimension_numbers<[1], [0], [0], [1], [0, 0, 1, 1], [], []>} : vector<8x768xbf16>, vector<768x128xbf16>, vector<8x128xf32> -> vector<8x128xf32>
    %c0_3 = arith.constant 0 : index
    %c0_4 = arith.constant 0 : index
    %3 = vector.load %arg4[%c0_3, %c0_4] : memref<1x128xf32, #tpu.memory_space<vmem>>, vector<1x128xf32>
    %4 = vector.broadcast %3 : vector<1x128xf32> to vector<8x128xf32>
    %5 = arith.addf %2, %4 : vector<8x128xf32>
    %cst_5 = arith.constant 0.000000e+00 : f32
    %6 = vector.broadcast %cst_5 : f32 to vector<8x128xf32>
    %7 = arith.maximumf %5, %6 : vector<8x128xf32>
    %c0_6 = arith.constant 0 : index
    %c0_7 = arith.constant 0 : index
    %8 = vector.load %arg2[%c0_6, %c0_7] : memref<8x1024xbf16, #tpu.memory_space<vmem>>, vector<8x1024xbf16>
    %c0_8 = arith.constant 0 : index
    %c0_9 = arith.constant 0 : index
    %9 = vector.load %arg5[%c0_8, %c0_9] : memref<1024x128xbf16, #tpu.memory_space<vmem>>, vector<1024x128xbf16>
    %cst_10 = arith.constant dense<0.000000e+00> : vector<8x128xf32>
    %10 = tpu.matmul %8, %9, %cst_10 {dimension_numbers = #tpu.dot_dimension_numbers<[1], [0], [0], [1], [0, 0, 1, 1], [], []>} : vector<8x1024xbf16>, vector<1024x128xbf16>, vector<8x128xf32> -> vector<8x128xf32>
    %c0_11 = arith.constant 0 : index
    %c0_12 = arith.constant 0 : index
    %11 = vector.load %arg6[%c0_11, %c0_12] : memref<1x128xf32, #tpu.memory_space<vmem>>, vector<1x128xf32>
    %12 = vector.broadcast %11 : vector<1x128xf32> to vector<8x128xf32>
    %13 = arith.addf %10, %12 : vector<8x128xf32>
    %cst_13 = arith.constant 0.000000e+00 : f32
    %14 = vector.broadcast %cst_13 : f32 to vector<8x128xf32>
    %15 = arith.maximumf %13, %14 : vector<8x128xf32>
    %16 = arith.truncf %7 : vector<8x128xf32> to vector<8x128xbf16>
    %c0_14 = arith.constant 0 : index
    %c0_15 = arith.constant 0 : index
    %17 = vector.load %arg7[%c0_14, %c0_15] : memref<128x128xbf16, #tpu.memory_space<vmem>>, vector<128x128xbf16>
    %cst_16 = arith.constant dense<0.000000e+00> : vector<8x128xf32>
    %18 = tpu.matmul %16, %17, %cst_16 {dimension_numbers = #tpu.dot_dimension_numbers<[1], [0], [0], [1], [0, 0, 1, 1], [], []>} : vector<8x128xbf16>, vector<128x128xbf16>, vector<8x128xf32> -> vector<8x128xf32>
    %19 = arith.truncf %15 : vector<8x128xf32> to vector<8x128xbf16>
    %c0_17 = arith.constant 0 : index
    %c0_18 = arith.constant 0 : index
    %20 = vector.load %arg8[%c0_17, %c0_18] : memref<128x128xbf16, #tpu.memory_space<vmem>>, vector<128x128xbf16>
    %cst_19 = arith.constant dense<0.000000e+00> : vector<8x128xf32>
    %21 = tpu.matmul %19, %20, %cst_19 {dimension_numbers = #tpu.dot_dimension_numbers<[1], [0], [0], [1], [0, 0, 1, 1], [], []>} : vector<8x128xbf16>, vector<128x128xbf16>, vector<8x128xf32> -> vector<8x128xf32>
    %22 = arith.addf %18, %21 : vector<8x128xf32>
    %c0_20 = arith.constant 0 : index
    %c0_21 = arith.constant 0 : index
    %23 = vector.load %arg9[%c0_20, %c0_21] : memref<1x128xf32, #tpu.memory_space<vmem>>, vector<1x128xf32>
    %24 = vector.broadcast %23 : vector<1x128xf32> to vector<8x128xf32>
    %25 = arith.addf %22, %24 : vector<8x128xf32>
    %c0_22 = arith.constant 0 : index
    %c0_23 = arith.constant 0 : index
    %26 = vector.load %arg10[%c0_22, %c0_23] : memref<8x128xf32, #tpu.memory_space<vmem>>, vector<8x128xf32>
    tpu.vector_store %arg10[%c0_22, %c0_23], %25 {strides = array<i32>} : memref<8x128xf32, #tpu.memory_space<vmem>>, vector<8x128xf32>,
    return
  }
  func.func @transform_0(%arg0: i32) -> (i32, i32) {
    %c0_i32 = arith.constant 0 : i32
    %c0_i32_0 = arith.constant 0 : i32
    return %arg0, %c0_i32 : i32, i32
  }
  func.func @transform_1(%arg0: i32) -> (i32, i32) {
    %c0_i32 = arith.constant 0 : i32
    %c0_i32_0 = arith.constant 0 : i32
    return %arg0, %c0_i32 : i32, i32
  }
  func.func @transform_2(%arg0: i32) -> (i32, i32) {
    %c0_i32 = arith.constant 0 : i32
    %c0_i32_0 = arith.constant 0 : i32
    %c0_i32_1 = arith.constant 0 : i32
    return %c0_i32, %c0_i32_0 : i32, i32
  }
  func.func @transform_3(%arg0: i32) -> (i32, i32) {
    %c0_i32 = arith.constant 0 : i32
    %c0_i32_0 = arith.constant 0 : i32
    %c0_i32_1 = arith.constant 0 : i32
    return %c0_i32, %c0_i32_0 : i32, i32
  }
  func.func @transform_4(%arg0: i32) -> (i32, i32) {
    %c0_i32 = arith.constant 0 : i32
    %c0_i32_0 = arith.constant 0 : i32
    %c0_i32_1 = arith.constant 0 : i32
    return %c0_i32, %c0_i32_0 : i32, i32
  }
  func.func @transform_5(%arg0: i32) -> (i32, i32) {
    %c0_i32 = arith.constant 0 : i32
    %c0_i32_0 = arith.constant 0 : i32
    %c0_i32_1 = arith.constant 0 : i32
    return %c0_i32, %c0_i32_0 : i32, i32
  }
  func.func @transform_6(%arg0: i32) -> (i32, i32) {
    %c0_i32 = arith.constant 0 : i32
    %c0_i32_0 = arith.constant 0 : i32
    %c0_i32_1 = arith.constant 0 : i32
    return %c0_i32, %c0_i32_0 : i32, i32
  }
  func.func @transform_7(%arg0: i32) -> (i32, i32) {
    %c0_i32 = arith.constant 0 : i32
    %c0_i32_0 = arith.constant 0 : i32
    %c0_i32_1 = arith.constant 0 : i32
    return %c0_i32, %c0_i32_0 : i32, i32
  }
  func.func @transform_8(%arg0: i32) -> (i32, i32) {
    %c0_i32 = arith.constant 0 : i32
    %c0_i32_0 = arith.constant 0 : i32
    %c0_i32_1 = arith.constant 0 : i32
    return %c0_i32, %c0_i32_0 : i32, i32
  }
  func.func @transform_9(%arg0: i32) -> (i32, i32) {
    %c0_i32 = arith.constant 0 : i32
    %c0_i32_0 = arith.constant 0 : i32
    return %arg0, %c0_i32 : i32, i32
  }
}

</mosaic_0001>

<llo_original>
// kernel: simple_model_head.1
$region0: #{simple_model_head.1}
  #allocation0 [shape = 'u32[]', space=smem, size = 0x4, offset = 0x4, fixed_abs, tag = 'smem constant byte address 0x4 - core index']
  #allocation1 [shape = 'u32[72,128]{1,0:T(1,128)}', space=vmem, size = 0x9000, scoped, tag = 'internal scratch']
  %s0 = inlined_call_operand.vmem [shape: bf16[8,768], index: 0, kind: input, shape index: {}]
  %s1 = inlined_call_operand.vmem [shape: bf16[8,1024], index: 1, kind: input, shape index: {}]
  %s2 = inlined_call_operand.hbm [shape: bf16[768,128], index: 2, kind: input, shape index: {}]
  %s3 = inlined_call_operand.vmem [shape: f32[1,128], index: 3, kind: input, shape index: {}]
  %s4 = inlined_call_operand.hbm [shape: bf16[1024,128], index: 4, kind: input, shape index: {}]
  %s5 = inlined_call_operand.vmem [shape: f32[1,128], index: 5, kind: input, shape index: {}]
  %s6 = inlined_call_operand.vmem [shape: bf16[128,128], index: 6, kind: input, shape index: {}]
  %s7 = inlined_call_operand.hbm [shape: bf16[128,128], index: 7, kind: input, shape index: {}]
  %s8 = inlined_call_operand.vmem [shape: f32[1,128], index: 8, kind: input, shape index: {}]
  %s9 = inlined_call_operand.vmem [shape: f32[8,128], index: 9, kind: output, shape index: {}]
  %s10 = sld [smem:[#allocation0]]
  $region58: #{simple_model_head.1} parent=0
    _
  %s12 = ssub.s32 1, %s10
  %s13 = scalar_select 0, %s12, %s10
  $region1: #{simple_model_head.1} parent=0
    #allocation2 [shape = 'u8[196608]{0}', space=vmem, size = 0x30000, scoped, tag = 'input window, operand 2, single buffered']
    #allocation3 [shape = 's32[1]{0}', space=sflag, size = 0x4, scoped, tag = 'scoped memory for simple_model_head.1']
    #allocation4 [shape = 'u8[262144]{0}', space=vmem, size = 0x40000, scoped, tag = 'input window, operand 4, single buffered']
    #allocation5 [shape = 's32[1]{0}', space=sflag, size = 0x4, scoped, tag = 'scoped memory for simple_model_head.1']
    #allocation6 [shape = 'u8[32768]{0}', space=vmem, size = 0x8000, scoped, tag = 'input window, operand 7, single buffered']
    %14 = vsyncpa [#allocation3], 0
    %15 = vsyncpa [#allocation5], 0
    // Predicated region
    $region2: #{simple_model_head.1} parent=1 // pred_check
      _
    $region3: #{simple_model_head.1} parent=1 // pred_check_branch
      %17 = sbr.rel (0) target = $region5
    $region4: #{simple_model_head.1} parent=1 // pred_region
      _
    $region5: #{simple_model_head.1} parent=1 // pred_fallthru
      _
    // Predicated region
    $region6: #{simple_model_head.1} parent=1 // pred_check
      _
    $region7: #{simple_model_head.1} parent=1 // pred_check_branch
      %19 = sbr.rel (0) target = $region9
    $region8: #{simple_model_head.1} parent=1 // pred_region
      _
    $region9: #{simple_model_head.1} parent=1 // pred_fallthru
      _
    // Predicated region
    $region10: #{simple_model_head.1} parent=1 // pred_check
      _
    $region11: #{simple_model_head.1} parent=1 // pred_check_branch
      %21 = sbr.rel (0) target = $region13
    $region12: #{simple_model_head.1} parent=1 // pred_region
      %23 = vsyncadd [#allocation3], 0
      %s24 = sshll.u32 %s2, 4
      %s25 = int_to_ptr.hbm [resolvable:$true] %s24
      %s26 = sshll.u32 [#allocation2], 4
      %s27 = int_to_ptr.vmem [resolvable:$true] %s26
      %32 = dma.hbm_to_vmem [thread:$0]  %s25, 6144, %s27, [#allocation3], 64, 64, 4
    $region13: #{simple_model_head.1} parent=1 // pred_fallthru
      _
    // Predicated region
    $region14: #{simple_model_head.1} parent=1 // pred_check
      _
    $region15: #{simple_model_head.1} parent=1 // pred_check_branch
      %34 = sbr.rel (0) target = $region17
    $region16: #{simple_model_head.1} parent=1 // pred_region
      _
    $region17: #{simple_model_head.1} parent=1 // pred_fallthru
      _
    // Predicated region
    $region18: #{simple_model_head.1} parent=1 // pred_check
      _
    $region19: #{simple_model_head.1} parent=1 // pred_check_branch
      %36 = sbr.rel (0) target = $region21
    $region20: #{simple_model_head.1} parent=1 // pred_region
      %38 = vsyncadd [#allocation5], 0
      %s39 = sshll.u32 %s4, 4
      %s40 = int_to_ptr.hbm [resolvable:$true] %s39
      %s41 = sshll.u32 [#allocation4], 4
      %s42 = int_to_ptr.vmem [resolvable:$true] %s41
      %47 = dma.hbm_to_vmem [thread:$0]  %s40, 8192, %s42, [#allocation5], 64, 64, 4
    $region21: #{simple_model_head.1} parent=1 // pred_fallthru
      _
    // Predicated region
    $region22: #{simple_model_head.1} parent=1 // pred_check
      _
    $region23: #{simple_model_head.1} parent=1 // pred_check_branch
      %49 = sbr.rel (0) target = $region25
    $region24: #{simple_model_head.1} parent=1 // pred_region
      _
    $region25: #{simple_model_head.1} parent=1 // pred_fallthru
      _
    // Predicated region
    $region26: #{simple_model_head.1} parent=1 // pred_check
      _
    $region27: #{simple_model_head.1} parent=1 // pred_check_branch
      %51 = sbr.rel (0) target = $region29
    $region28: #{simple_model_head.1} parent=1 // pred_region
      _
    $region29: #{simple_model_head.1} parent=1 // pred_fallthru
      _
    // Predicated region
    $region30: #{simple_model_head.1} parent=1 // pred_check
      _
    $region31: #{simple_model_head.1} parent=1 // pred_check_branch
      %53 = sbr.rel (0) target = $region33
    $region32: #{simple_model_head.1} parent=1 // pred_region
      %55 = vsyncadd [#allocation5], 0
      %s56 = sshll.u32 %s7, 4
      %s57 = int_to_ptr.hbm [resolvable:$true] %s56
      %s58 = sshll.u32 [#allocation6], 4
      %s59 = int_to_ptr.vmem [resolvable:$true] %s58
      %64 = dma.hbm_to_vmem [thread:$0]  %s57, 1024, %s59, [#allocation5], 64, 64, 4
    $region33: #{simple_model_head.1} parent=1 // pred_fallthru
      _
    // Predicated region
    $region34: #{simple_model_head.1} parent=1 // pred_check
      _
    $region35: #{simple_model_head.1} parent=1 // pred_check_branch
      %66 = sbr.rel (0) target = $region37
    $region36: #{simple_model_head.1} parent=1 // pred_region
      _
    $region37: #{simple_model_head.1} parent=1 // pred_fallthru
      _
    // Predicated region
    $region38: #{simple_model_head.1} parent=1 // pred_check
      _
    $region39: #{simple_model_head.1} parent=1 // pred_check_branch
      %68 = sbr.rel (0) target = $region41
    $region40: #{simple_model_head.1} parent=1 // pred_region
      %70 = dma.done [#allocation3], 6144
    $region41: #{simple_model_head.1} parent=1 // pred_fallthru
      _
    // Predicated region
    $region42: #{simple_model_head.1} parent=1 // pred_check
      _
    $region43: #{simple_model_head.1} parent=1 // pred_check_branch
      %72 = sbr.rel (0) target = $region45
    $region44: #{simple_model_head.1} parent=1 // pred_region
      %74 = dma.done [#allocation5], 8192
    $region45: #{simple_model_head.1} parent=1 // pred_fallthru
      _
    // Predicated region
    $region46: #{simple_model_head.1} parent=1 // pred_check
      _
    $region47: #{simple_model_head.1} parent=1 // pred_check_branch
      %76 = sbr.rel (0) target = $region49
    $region48: #{simple_model_head.1} parent=1 // pred_region
      %78 = dma.done [#allocation5], 1024
    $region49: #{simple_model_head.1} parent=1 // pred_fallthru
      _
    %v79 = vld [vmem:[%s0] sm:$0xff]
    %v80 = vld [vmem:[%s0 + $0x8] sm:$0xff]
    %v81 = vld [vmem:[%s0 + $0x10] sm:$0xff]
    %v82 = vld [vmem:[#allocation2] sm:$0xf]
    %v83 = vld [vmem:[#allocation2 + $0x4] sm:$0xf]
    %v84 = vld [vmem:[#allocation2 + $0x8] sm:$0xf]
    %v85 = vld [vmem:[#allocation2 + $0xc] sm:$0xf]
    %v86 = vld [vmem:[#allocation2 + $0x10] sm:$0xf]
    %v87 = vld [vmem:[#allocation2 + $0x14] sm:$0xf]
    %v88 = vld [vmem:[#allocation2 + $0x18] sm:$0xf]
    %v89 = vld [vmem:[#allocation2 + $0x1c] sm:$0xf]
    %v90 = vld [vmem:[#allocation2 + $0x20] sm:$0xf]
    %v91 = vld [vmem:[#allocation2 + $0x24] sm:$0xf]
    %v92 = vld [vmem:[#allocation2 + $0x28] sm:$0xf]
    %v93 = vld [vmem:[#allocation2 + $0x2c] sm:$0xf]
    %v94 = vld [vmem:[#allocation2 + $0x30] sm:$0xf]
    %v95 = vld [vmem:[#allocation2 + $0x34] sm:$0xf]
    %v96 = vld [vmem:[#allocation2 + $0x38] sm:$0xf]
    %v97 = vld [vmem:[#allocation2 + $0x3c] sm:$0xf]
    %v98 = vld [vmem:[#allocation2 + $0x40] sm:$0xf]
    %v99 = vld [vmem:[#allocation2 + $0x44] sm:$0xf]
    %v100 = vld [vmem:[#allocation2 + $0x48] sm:$0xf]
    %v101 = vld [vmem:[#allocation2 + $0x4c] sm:$0xf]
    %v102 = vld [vmem:[#allocation2 + $0x50] sm:$0xf]
    %v103 = vld [vmem:[#allocation2 + $0x54] sm:$0xf]
    %v104 = vld [vmem:[#allocation2 + $0x58] sm:$0xf]
    %v105 = vld [vmem:[#allocation2 + $0x5c] sm:$0xf]
    %v106 = vld [vmem:[#allocation2 + $0x60] sm:$0xf]
    %v107 = vld [vmem:[#allocation2 + $0x64] sm:$0xf]
    %v108 = vld [vmem:[#allocation2 + $0x68] sm:$0xf]
    %v109 = vld [vmem:[#allocation2 + $0x6c] sm:$0xf]
    %v110 = vld [vmem:[#allocation2 + $0x70] sm:$0xf]
    %v111 = vld [vmem:[#allocation2 + $0x74] sm:$0xf]
    %v112 = vld [vmem:[#allocation2 + $0x78] sm:$0xf]
    %v113 = vld [vmem:[#allocation2 + $0x7c] sm:$0xf]
    %v114 = vld [vmem:[#allocation2 + $0x80] sm:$0xf]
    %v115 = vld [vmem:[#allocation2 + $0x84] sm:$0xf]
    %v116 = vld [vmem:[#allocation2 + $0x88] sm:$0xf]
    %v117 = vld [vmem:[#allocation2 + $0x8c] sm:$0xf]
    %v118 = vld [vmem:[#allocation2 + $0x90] sm:$0xf]
    %v119 = vld [vmem:[#allocation2 + $0x94] sm:$0xf]
    %v120 = vld [vmem:[#allocation2 + $0x98] sm:$0xf]
    %v121 = vld [vmem:[#allocation2 + $0x9c] sm:$0xf]
    %v122 = vld [vmem:[#allocation2 + $0xa0] sm:$0xf]
    %v123 = vld [vmem:[#allocation2 + $0xa4] sm:$0xf]
    %v124 = vld [vmem:[#allocation2 + $0xa8] sm:$0xf]
    %v125 = vld [vmem:[#allocation2 + $0xac] sm:$0xf]
    %v126 = vld [vmem:[#allocation2 + $0xb0] sm:$0xf]
    %v127 = vld [vmem:[#allocation2 + $0xb4] sm:$0xf]
    %v128 = vld [vmem:[#allocation2 + $0xb8] sm:$0xf]
    %v129 = vld [vmem:[#allocation2 + $0xbc] sm:$0xf]
    %v130 = vld [vmem:[#allocation2 + $0xc0] sm:$0xf]
    %v131 = vld [vmem:[#allocation2 + $0xc4] sm:$0xf]
    %v132 = vld [vmem:[#allocation2 + $0xc8] sm:$0xf]
    %v133 = vld [vmem:[#allocation2 + $0xcc] sm:$0xf]
    %v134 = vld [vmem:[#allocation2 + $0xd0] sm:$0xf]
    %v135 = vld [vmem:[#allocation2 + $0xd4] sm:$0xf]
    %v136 = vld [vmem:[#allocation2 + $0xd8] sm:$0xf]
    %v137 = vld [vmem:[#allocation2 + $0xdc] sm:$0xf]
    %v138 = vld [vmem:[#allocation2 + $0xe0] sm:$0xf]
    %v139 = vld [vmem:[#allocation2 + $0xe4] sm:$0xf]
    %v140 = vld [vmem:[#allocation2 + $0xe8] sm:$0xf]
    %v141 = vld [vmem:[#allocation2 + $0xec] sm:$0xf]
    %v142 = vld [vmem:[#allocation2 + $0xf0] sm:$0xf]
    %v143 = vld [vmem:[#allocation2 + $0xf4] sm:$0xf]
    %v144 = vld [vmem:[#allocation2 + $0xf8] sm:$0xf]
    %v145 = vld [vmem:[#allocation2 + $0xfc] sm:$0xf]
    %v146 = vld [vmem:[#allocation2 + $0x100] sm:$0xf]
    %v147 = vld [vmem:[#allocation2 + $0x104] sm:$0xf]
    %v148 = vld [vmem:[#allocation2 + $0x108] sm:$0xf]
    %v149 = vld [vmem:[#allocation2 + $0x10c] sm:$0xf]
    %v150 = vld [vmem:[#allocation2 + $0x110] sm:$0xf]
    %v151 = vld [vmem:[#allocation2 + $0x114] sm:$0xf]
    %v152 = vld [vmem:[#allocation2 + $0x118] sm:$0xf]
    %v153 = vld [vmem:[#allocation2 + $0x11c] sm:$0xf]
    %v154 = vld [vmem:[#allocation2 + $0x120] sm:$0xf]
    %v155 = vld [vmem:[#allocation2 + $0x124] sm:$0xf]
    %v156 = vld [vmem:[#allocation2 + $0x128] sm:$0xf]
    %v157 = vld [vmem:[#allocation2 + $0x12c] sm:$0xf]
    %v158 = vld [vmem:[#allocation2 + $0x130] sm:$0xf]
    %v159 = vld [vmem:[#allocation2 + $0x134] sm:$0xf]
    %v160 = vld [vmem:[#allocation2 + $0x138] sm:$0xf]
    %v161 = vld [vmem:[#allocation2 + $0x13c] sm:$0xf]
    %v162 = vld [vmem:[#allocation2 + $0x140] sm:$0xf]
    %v163 = vld [vmem:[#allocation2 + $0x144] sm:$0xf]
    %v164 = vld [vmem:[#allocation2 + $0x148] sm:$0xf]
    %v165 = vld [vmem:[#allocation2 + $0x14c] sm:$0xf]
    %v166 = vld [vmem:[#allocation2 + $0x150] sm:$0xf]
    %v167 = vld [vmem:[#allocation2 + $0x154] sm:$0xf]
    %v168 = vld [vmem:[#allocation2 + $0x158] sm:$0xf]
    %v169 = vld [vmem:[#allocation2 + $0x15c] sm:$0xf]
    %v170 = vld [vmem:[#allocation2 + $0x160] sm:$0xf]
    %v171 = vld [vmem:[#allocation2 + $0x164] sm:$0xf]
    %v172 = vld [vmem:[#allocation2 + $0x168] sm:$0xf]
    %v173 = vld [vmem:[#allocation2 + $0x16c] sm:$0xf]
    %v174 = vld [vmem:[#allocation2 + $0x170] sm:$0xf]
    %v175 = vld [vmem:[#allocation2 + $0x174] sm:$0xf]
    %v176 = vld [vmem:[#allocation2 + $0x178] sm:$0xf]
    %v177 = vld [vmem:[#allocation2 + $0x17c] sm:$0xf]
    %v178 = vld [vmem:[%s3] sm:$0x1]
    %v180 = vperm.slane %v178, 0
    %v185 = vunpack.c.l.b16 %v79
    %v186 = vunpack.c.h.b16 %v79
    %v187 = vunpack.c.l.b16 %v80
    %v188 = vunpack.c.h.b16 %v80
    %v189 = vunpack.c.l.b16 %v81
    %v190 = vunpack.c.h.b16 %v81
    %v191 = vpack.c.b16 %v185, %v185
    %v192 = vpack.c.b16 %v186, %v186
    %v193 = vpack.c.b16 %v187, %v187
    %v194 = vpack.c.b16 %v188, %v188
    %v195 = vpack.c.b16 %v189, %v189
    %v196 = vpack.c.b16 %v190, %v190
    %v299 = vunpack.c.l.b16 %v82
    %v300 = vunpack.c.l.b16 %v83
    %v301 = vunpack.c.l.b16 %v84
    %v302 = vunpack.c.l.b16 %v85
    %v303 = vunpack.c.l.b16 %v86
    %v304 = vunpack.c.l.b16 %v87
    %v305 = vunpack.c.l.b16 %v88
    %v306 = vunpack.c.l.b16 %v89
    %v307 = vunpack.c.l.b16 %v90
    %v308 = vunpack.c.l.b16 %v91
    %v309 = vunpack.c.l.b16 %v92
    %v310 = vunpack.c.l.b16 %v93
    %v311 = vunpack.c.l.b16 %v94
    %v312 = vunpack.c.l.b16 %v95
    %v313 = vunpack.c.l.b16 %v96
    %v314 = vunpack.c.l.b16 %v97
    %v315 = vunpack.c.l.b16 %v98
    %v316 = vunpack.c.l.b16 %v99
    %v317 = vunpack.c.l.b16 %v100
    %v318 = vunpack.c.l.b16 %v101
    %v319 = vunpack.c.l.b16 %v102
    %v320 = vunpack.c.l.b16 %v103
    %v321 = vunpack.c.l.b16 %v104
    %v322 = vunpack.c.l.b16 %v105
    %v323 = vunpack.c.l.b16 %v106
    %v324 = vunpack.c.l.b16 %v107
    %v325 = vunpack.c.l.b16 %v108
    %v326 = vunpack.c.l.b16 %v109
    %v327 = vunpack.c.l.b16 %v110
    %v328 = vunpack.c.l.b16 %v111
    %v329 = vunpack.c.l.b16 %v112
    %v330 = vunpack.c.l.b16 %v113
    %v331 = vunpack.c.l.b16 %v114
    %v332 = vunpack.c.l.b16 %v115
    %v333 = vunpack.c.l.b16 %v116
    %v334 = vunpack.c.l.b16 %v117
    %v335 = vunpack.c.l.b16 %v118
    %v336 = vunpack.c.l.b16 %v119
    %v337 = vunpack.c.l.b16 %v120
    %v338 = vunpack.c.l.b16 %v121
    %v339 = vunpack.c.l.b16 %v122
    %v340 = vunpack.c.l.b16 %v123
    %v341 = vunpack.c.l.b16 %v124
    %v342 = vunpack.c.l.b16 %v125
    %v343 = vunpack.c.l.b16 %v126
    %v344 = vunpack.c.l.b16 %v127
    %v345 = vunpack.c.l.b16 %v128
    %v346 = vunpack.c.l.b16 %v129
    %v347 = vunpack.c.l.b16 %v130
    %v348 = vunpack.c.l.b16 %v131
    %v349 = vunpack.c.l.b16 %v132
    %v350 = vunpack.c.l.b16 %v133
    %v351 = vunpack.c.l.b16 %v134
    %v352 = vunpack.c.l.b16 %v135
    %v353 = vunpack.c.l.b16 %v136
    %v354 = vunpack.c.l.b16 %v137
    %v355 = vunpack.c.l.b16 %v138
    %v356 = vunpack.c.l.b16 %v139
    %v357 = vunpack.c.l.b16 %v140
    %v358 = vunpack.c.l.b16 %v141
    %v359 = vunpack.c.l.b16 %v142
    %v360 = vunpack.c.l.b16 %v143
    %v361 = vunpack.c.l.b16 %v144
    %v362 = vunpack.c.l.b16 %v145
    %v363 = vunpack.c.l.b16 %v146
    %v364 = vunpack.c.l.b16 %v147
    %v365 = vunpack.c.l.b16 %v148
    %v366 = vunpack.c.l.b16 %v149
    %v367 = vunpack.c.l.b16 %v150
    %v368 = vunpack.c.l.b16 %v151
    %v369 = vunpack.c.l.b16 %v152
    %v370 = vunpack.c.l.b16 %v153
    %v371 = vunpack.c.l.b16 %v154
    %v372 = vunpack.c.l.b16 %v155
    %v373 = vunpack.c.l.b16 %v156
    %v374 = vunpack.c.l.b16 %v157
    %v375 = vunpack.c.l.b16 %v158
    %v376 = vunpack.c.l.b16 %v159
    %v377 = vunpack.c.l.b16 %v160
    %v378 = vunpack.c.l.b16 %v161
    %v379 = vunpack.c.l.b16 %v162
    %v380 = vunpack.c.l.b16 %v163
    %v381 = vunpack.c.l.b16 %v164
    %v382 = vunpack.c.l.b16 %v165
    %v383 = vunpack.c.l.b16 %v166
    %v384 = vunpack.c.l.b16 %v167
    %v385 = vunpack.c.l.b16 %v168
    %v386 = vunpack.c.l.b16 %v169
    %v387 = vunpack.c.l.b16 %v170
    %v388 = vunpack.c.l.b16 %v171
    %v389 = vunpack.c.l.b16 %v172
    %v390 = vunpack.c.l.b16 %v173
    %v391 = vunpack.c.l.b16 %v174
    %v392 = vunpack.c.l.b16 %v175
    %v393 = vunpack.c.l.b16 %v176
    %v394 = vunpack.c.l.b16 %v177
    %v395 = vpack.c.b16 %v300, %v299
    %v396 = vpack.c.b16 %v302, %v301
    %v397 = vpack.c.b16 %v304, %v303
    %v398 = vpack.c.b16 %v306, %v305
    %v399 = vpack.c.b16 %v308, %v307
    %v400 = vpack.c.b16 %v310, %v309
    %v401 = vpack.c.b16 %v312, %v311
    %v402 = vpack.c.b16 %v314, %v313
    %v403 = vpack.c.b16 %v316, %v315
    %v404 = vpack.c.b16 %v318, %v317
    %v405 = vpack.c.b16 %v320, %v319
    %v406 = vpack.c.b16 %v322, %v321
    %v407 = vpack.c.b16 %v324, %v323
    %v408 = vpack.c.b16 %v326, %v325
    %v409 = vpack.c.b16 %v328, %v327
    %v410 = vpack.c.b16 %v330, %v329
    %v411 = vpack.c.b16 %v332, %v331
    %v412 = vpack.c.b16 %v334, %v333
    %v413 = vpack.c.b16 %v336, %v335
    %v414 = vpack.c.b16 %v338, %v337
    %v415 = vpack.c.b16 %v340, %v339
    %v416 = vpack.c.b16 %v342, %v341
    %v417 = vpack.c.b16 %v344, %v343
    %v418 = vpack.c.b16 %v346, %v345
    %v419 = vpack.c.b16 %v348, %v347
    %v420 = vpack.c.b16 %v350, %v349
    %v421 = vpack.c.b16 %v352, %v351
    %v422 = vpack.c.b16 %v354, %v353
    %v423 = vpack.c.b16 %v356, %v355
    %v424 = vpack.c.b16 %v358, %v357
    %v425 = vpack.c.b16 %v360, %v359
    %v426 = vpack.c.b16 %v362, %v361
    %v427 = vpack.c.b16 %v364, %v363
    %v428 = vpack.c.b16 %v366, %v365
    %v429 = vpack.c.b16 %v368, %v367
    %v430 = vpack.c.b16 %v370, %v369
    %v431 = vpack.c.b16 %v372, %v371
    %v432 = vpack.c.b16 %v374, %v373
    %v433 = vpack.c.b16 %v376, %v375
    %v434 = vpack.c.b16 %v378, %v377
    %v435 = vpack.c.b16 %v380, %v379
    %v436 = vpack.c.b16 %v382, %v381
    %v437 = vpack.c.b16 %v384, %v383
    %v438 = vpack.c.b16 %v386, %v385
    %v439 = vpack.c.b16 %v388, %v387
    %v440 = vpack.c.b16 %v390, %v389
    %v441 = vpack.c.b16 %v392, %v391
    %v442 = vpack.c.b16 %v394, %v393
    %491 = vmatpush.bf16.msra.mxu0 %v402
    %492 = vmatpush.bf16.msra.mxu0 %v401
    %493 = vmatpush.bf16.msra.mxu0 %v400
    %494 = vmatpush.bf16.msra.mxu0 %v399
    %495 = vmatpush.bf16.msra.mxu0 %v398
    %496 = vmatpush.bf16.msra.mxu0 %v397
    %497 = vmatpush.bf16.msra.mxu0 %v396
    %498 = vmatpush.bf16.msra.mxu0 %v395
    %499 = vmatmul.bf16.gmra.mxu0 %v191
    %v500 = vpop.f32.mrf.mxu0
    %v501 = vadd.f32 %v180, %v500
    %v502 = vpop.f32.mrf.mxu0
    %503 = vdwg.mxu0
    %504 = vmatpush.bf16.msra.mxu0 %v410
    %505 = vmatpush.bf16.msra.mxu0 %v409
    %506 = vmatpush.bf16.msra.mxu0 %v408
    %507 = vmatpush.bf16.msra.mxu0 %v407
    %508 = vmatpush.bf16.msra.mxu0 %v406
    %509 = vmatpush.bf16.msra.mxu0 %v405
    %510 = vmatpush.bf16.msra.mxu0 %v404
    %511 = vmatpush.bf16.msra.mxu0 %v403
    %512 = vmatmul.bf16.gmra.mxu0 %v192
    %v513 = vpop.f32.mrf.mxu0
    %v514 = vadd.f32 %v501, %v513
    %v515 = vpop.f32.mrf.mxu0
    %516 = vdwg.mxu0
    %517 = vmatpush.bf16.msra.mxu0 %v418
    %518 = vmatpush.bf16.msra.mxu0 %v417
    %519 = vmatpush.bf16.msra.mxu0 %v416
    %520 = vmatpush.bf16.msra.mxu0 %v415
    %521 = vmatpush.bf16.msra.mxu0 %v414
    %522 = vmatpush.bf16.msra.mxu0 %v413
    %523 = vmatpush.bf16.msra.mxu0 %v412
    %524 = vmatpush.bf16.msra.mxu0 %v411
    %525 = vmatmul.bf16.gmra.mxu0 %v193
    %v526 = vpop.f32.mrf.mxu0
    %v527 = vadd.f32 %v514, %v526
    %v528 = vpop.f32.mrf.mxu0
    %529 = vdwg.mxu0
    %530 = vmatpush.bf16.msra.mxu0 %v426
    %531 = vmatpush.bf16.msra.mxu0 %v425
    %532 = vmatpush.bf16.msra.mxu0 %v424
    %533 = vmatpush.bf16.msra.mxu0 %v423
    %534 = vmatpush.bf16.msra.mxu0 %v422
    %535 = vmatpush.bf16.msra.mxu0 %v421
    %536 = vmatpush.bf16.msra.mxu0 %v420
    %537 = vmatpush.bf16.msra.mxu0 %v419
    %538 = vmatmul.bf16.gmra.mxu0 %v194
    %v539 = vpop.f32.mrf.mxu0
    %v540 = vadd.f32 %v527, %v539
    %v541 = vpop.f32.mrf.mxu0
    %542 = vdwg.mxu0
    %543 = vmatpush.bf16.msra.mxu0 %v434
    %544 = vmatpush.bf16.msra.mxu0 %v433
    %545 = vmatpush.bf16.msra.mxu0 %v432
    %546 = vmatpush.bf16.msra.mxu0 %v431
    %547 = vmatpush.bf16.msra.mxu0 %v430
    %548 = vmatpush.bf16.msra.mxu0 %v429
    %549 = vmatpush.bf16.msra.mxu0 %v428
    %550 = vmatpush.bf16.msra.mxu0 %v427
    %551 = vmatmul.bf16.gmra.mxu0 %v195
    %v552 = vpop.f32.mrf.mxu0
    %v553 = vadd.f32 %v540, %v552
    %v554 = vpop.f32.mrf.mxu0
    %555 = vdwg.mxu0
    %556 = vmatpush.bf16.msra.mxu0 %v442
    %557 = vmatpush.bf16.msra.mxu0 %v441
    %558 = vmatpush.bf16.msra.mxu0 %v440
    %559 = vmatpush.bf16.msra.mxu0 %v439
    %560 = vmatpush.bf16.msra.mxu0 %v438
    %561 = vmatpush.bf16.msra.mxu0 %v437
    %562 = vmatpush.bf16.msra.mxu0 %v436
    %563 = vmatpush.bf16.msra.mxu0 %v435
    %564 = vmatmul.bf16.gmra.mxu0 %v196
    %v565 = vpop.f32.mrf.mxu0
    %v566 = vadd.f32 %v553, %v565
    %v567 = vpop.f32.mrf.mxu0
    %568 = vdwg.mxu0
    %v569 = vmax.f32 %v566, 0.0
    %v570 = vld [vmem:[%s1] sm:$0xff]
    %v571 = vld [vmem:[%s1 + $0x8] sm:$0xff]
    %v572 = vld [vmem:[%s1 + $0x10] sm:$0xff]
    %v573 = vld [vmem:[%s1 + $0x18] sm:$0xff]
    %v574 = vld [vmem:[#allocation4] sm:$0xf]
    %v575 = vld [vmem:[#allocation4 + $0x4] sm:$0xf]
    %v576 = vld [vmem:[#allocation4 + $0x8] sm:$0xf]
    %v577 = vld [vmem:[#allocation4 + $0xc] sm:$0xf]
    %v578 = vld [vmem:[#allocation4 + $0x10] sm:$0xf]
    %v579 = vld [vmem:[#allocation4 + $0x14] sm:$0xf]
    %v580 = vld [vmem:[#allocation4 + $0x18] sm:$0xf]
    %v581 = vld [vmem:[#allocation4 + $0x1c] sm:$0xf]
    %v582 = vld [vmem:[#allocation4 + $0x20] sm:$0xf]
    %v583 = vld [vmem:[#allocation4 + $0x24] sm:$0xf]
    %v584 = vld [vmem:[#allocation4 + $0x28] sm:$0xf]
    %v585 = vld [vmem:[#allocation4 + $0x2c] sm:$0xf]
    %v586 = vld [vmem:[#allocation4 + $0x30] sm:$0xf]
    %v587 = vld [vmem:[#allocation4 + $0x34] sm:$0xf]
    %v588 = vld [vmem:[#allocation4 + $0x38] sm:$0xf]
    %v589 = vld [vmem:[#allocation4 + $0x3c] sm:$0xf]
    %v590 = vld [vmem:[#allocation4 + $0x40] sm:$0xf]
    %v591 = vld [vmem:[#allocation4 + $0x44] sm:$0xf]
    %v592 = vld [vmem:[#allocation4 + $0x48] sm:$0xf]
    %v593 = vld [vmem:[#allocation4 + $0x4c] sm:$0xf]
    %v594 = vld [vmem:[#allocation4 + $0x50] sm:$0xf]
    %v595 = vld [vmem:[#allocation4 + $0x54] sm:$0xf]
    %v596 = vld [vmem:[#allocation4 + $0x58] sm:$0xf]
    %v597 = vld [vmem:[#allocation4 + $0x5c] sm:$0xf]
    %v598 = vld [vmem:[#allocation4 + $0x60] sm:$0xf]
    %v599 = vld [vmem:[#allocation4 + $0x64] sm:$0xf]
    %v600 = vld [vmem:[#allocation4 + $0x68] sm:$0xf]
    %v601 = vld [vmem:[#allocation4 + $0x6c] sm:$0xf]
    %v602 = vld [vmem:[#allocation4 + $0x70] sm:$0xf]
    %v603 = vld [vmem:[#allocation4 + $0x74] sm:$0xf]
    %v604 = vld [vmem:[#allocation4 + $0x78] sm:$0xf]
    %v605 = vld [vmem:[#allocation4 + $0x7c] sm:$0xf]
    %v606 = vld [vmem:[#allocation4 + $0x80] sm:$0xf]
    %v607 = vld [vmem:[#allocation4 + $0x84] sm:$0xf]
    %v608 = vld [vmem:[#allocation4 + $0x88] sm:$0xf]
    %v609 = vld [vmem:[#allocation4 + $0x8c] sm:$0xf]
    %v610 = vld [vmem:[#allocation4 + $0x90] sm:$0xf]
    %v611 = vld [vmem:[#allocation4 + $0x94] sm:$0xf]
    %v612 = vld [vmem:[#allocation4 + $0x98] sm:$0xf]
    %v613 = vld [vmem:[#allocation4 + $0x9c] sm:$0xf]
    %v614 = vld [vmem:[#allocation4 + $0xa0] sm:$0xf]
    %v615 = vld [vmem:[#allocation4 + $0xa4] sm:$0xf]
    %v616 = vld [vmem:[#allocation4 + $0xa8] sm:$0xf]
    %v617 = vld [vmem:[#allocation4 + $0xac] sm:$0xf]
    %v618 = vld [vmem:[#allocation4 + $0xb0] sm:$0xf]
    %v619 = vld [vmem:[#allocation4 + $0xb4] sm:$0xf]
    %v620 = vld [vmem:[#allocation4 + $0xb8] sm:$0xf]
    %v621 = vld [vmem:[#allocation4 + $0xbc] sm:$0xf]
    %v622 = vld [vmem:[#allocation4 + $0xc0] sm:$0xf]
    %v623 = vld [vmem:[#allocation4 + $0xc4] sm:$0xf]
    %v624 = vld [vmem:[#allocation4 + $0xc8] sm:$0xf]
    %v625 = vld [vmem:[#allocation4 + $0xcc] sm:$0xf]
    %v626 = vld [vmem:[#allocation4 + $0xd0] sm:$0xf]
    %v627 = vld [vmem:[#allocation4 + $0xd4] sm:$0xf]
    %v628 = vld [vmem:[#allocation4 + $0xd8] sm:$0xf]
    %v629 = vld [vmem:[#allocation4 + $0xdc] sm:$0xf]
    %v630 = vld [vmem:[#allocation4 + $0xe0] sm:$0xf]
    %v631 = vld [vmem:[#allocation4 + $0xe4] sm:$0xf]
    %v632 = vld [vmem:[#allocation4 + $0xe8] sm:$0xf]
    %v633 = vld [vmem:[#allocation4 + $0xec] sm:$0xf]
    %v634 = vld [vmem:[#allocation4 + $0xf0] sm:$0xf]
    %v635 = vld [vmem:[#allocation4 + $0xf4] sm:$0xf]
    %v636 = vld [vmem:[#allocation4 + $0xf8] sm:$0xf]
    %v637 = vld [vmem:[#allocation4 + $0xfc] sm:$0xf]
    %v638 = vld [vmem:[#allocation4 + $0x100] sm:$0xf]
    %v639 = vld [vmem:[#allocation4 + $0x104] sm:$0xf]
    %v640 = vld [vmem:[#allocation4 + $0x108] sm:$0xf]
    %v641 = vld [vmem:[#allocation4 + $0x10c] sm:$0xf]
    %v642 = vld [vmem:[#allocation4 + $0x110] sm:$0xf]
    %v643 = vld [vmem:[#allocation4 + $0x114] sm:$0xf]
    %v644 = vld [vmem:[#allocation4 + $0x118] sm:$0xf]
    %v645 = vld [vmem:[#allocation4 + $0x11c] sm:$0xf]
    %v646 = vld [vmem:[#allocation4 + $0x120] sm:$0xf]
    %v647 = vld [vmem:[#allocation4 + $0x124] sm:$0xf]
    %v648 = vld [vmem:[#allocation4 + $0x128] sm:$0xf]
    %v649 = vld [vmem:[#allocation4 + $0x12c] sm:$0xf]
    %v650 = vld [vmem:[#allocation4 + $0x130] sm:$0xf]
    %v651 = vld [vmem:[#allocation4 + $0x134] sm:$0xf]
    %v652 = vld [vmem:[#allocation4 + $0x138] sm:$0xf]
    %v653 = vld [vmem:[#allocation4 + $0x13c] sm:$0xf]
    %v654 = vld [vmem:[#allocation4 + $0x140] sm:$0xf]
    %v655 = vld [vmem:[#allocation4 + $0x144] sm:$0xf]
    %v656 = vld [vmem:[#allocation4 + $0x148] sm:$0xf]
    %v657 = vld [vmem:[#allocation4 + $0x14c] sm:$0xf]
    %v658 = vld [vmem:[#allocation4 + $0x150] sm:$0xf]
    %v659 = vld [vmem:[#allocation4 + $0x154] sm:$0xf]
    %v660 = vld [vmem:[#allocation4 + $0x158] sm:$0xf]
    %v661 = vld [vmem:[#allocation4 + $0x15c] sm:$0xf]
    %v662 = vld [vmem:[#allocation4 + $0x160] sm:$0xf]
    %v663 = vld [vmem:[#allocation4 + $0x164] sm:$0xf]
    %v664 = vld [vmem:[#allocation4 + $0x168] sm:$0xf]
    %v665 = vld [vmem:[#allocation4 + $0x16c] sm:$0xf]
    %v666 = vld [vmem:[#allocation4 + $0x170] sm:$0xf]
    %v667 = vld [vmem:[#allocation4 + $0x174] sm:$0xf]
    %v668 = vld [vmem:[#allocation4 + $0x178] sm:$0xf]
    %v669 = vld [vmem:[#allocation4 + $0x17c] sm:$0xf]
    %v670 = vld [vmem:[#allocation4 + $0x180] sm:$0xf]
    %v671 = vld [vmem:[#allocation4 + $0x184] sm:$0xf]
    %v672 = vld [vmem:[#allocation4 + $0x188] sm:$0xf]
    %v673 = vld [vmem:[#allocation4 + $0x18c] sm:$0xf]
    %v674 = vld [vmem:[#allocation4 + $0x190] sm:$0xf]
    %v675 = vld [vmem:[#allocation4 + $0x194] sm:$0xf]
    %v676 = vld [vmem:[#allocation4 + $0x198] sm:$0xf]
    %v677 = vld [vmem:[#allocation4 + $0x19c] sm:$0xf]
    %v678 = vld [vmem:[#allocation4 + $0x1a0] sm:$0xf]
    %v679 = vld [vmem:[#allocation4 + $0x1a4] sm:$0xf]
    %v680 = vld [vmem:[#allocation4 + $0x1a8] sm:$0xf]
    %v681 = vld [vmem:[#allocation4 + $0x1ac] sm:$0xf]
    %v682 = vld [vmem:[#allocation4 + $0x1b0] sm:$0xf]
    %v683 = vld [vmem:[#allocation4 + $0x1b4] sm:$0xf]
    %v684 = vld [vmem:[#allocation4 + $0x1b8] sm:$0xf]
    %v685 = vld [vmem:[#allocation4 + $0x1bc] sm:$0xf]
    %v686 = vld [vmem:[#allocation4 + $0x1c0] sm:$0xf]
    %v687 = vld [vmem:[#allocation4 + $0x1c4] sm:$0xf]
    %v688 = vld [vmem:[#allocation4 + $0x1c8] sm:$0xf]
    %v689 = vld [vmem:[#allocation4 + $0x1cc] sm:$0xf]
    %v690 = vld [vmem:[#allocation4 + $0x1d0] sm:$0xf]
    %v691 = vld [vmem:[#allocation4 + $0x1d4] sm:$0xf]
    %v692 = vld [vmem:[#allocation4 + $0x1d8] sm:$0xf]
    %v693 = vld [vmem:[#allocation4 + $0x1dc] sm:$0xf]
    %v694 = vld [vmem:[#allocation4 + $0x1e0] sm:$0xf]
    %v695 = vld [vmem:[#allocation4 + $0x1e4] sm:$0xf]
    %v696 = vld [vmem:[#allocation4 + $0x1e8] sm:$0xf]
    %v697 = vld [vmem:[#allocation4 + $0x1ec] sm:$0xf]
    %v698 = vld [vmem:[#allocation4 + $0x1f0] sm:$0xf]
    %v699 = vld [vmem:[#allocation4 + $0x1f4] sm:$0xf]
    %v700 = vld [vmem:[#allocation4 + $0x1f8] sm:$0xf]
    %v701 = vld [vmem:[#allocation4 + $0x1fc] sm:$0xf]
    %v702 = vld [vmem:[%s5] sm:$0x1]
    %v704 = vperm.slane %v702, 0
    %v710 = vunpack.c.l.b16 %v570
    %v711 = vunpack.c.h.b16 %v570
    %v712 = vunpack.c.l.b16 %v571
    %v713 = vunpack.c.h.b16 %v571
    %v714 = vunpack.c.l.b16 %v572
    %v715 = vunpack.c.h.b16 %v572
    %v716 = vunpack.c.l.b16 %v573
    %v717 = vunpack.c.h.b16 %v573
    %v718 = vpack.c.b16 %v710, %v710
    %v719 = vpack.c.b16 %v711, %v711
    %v720 = vpack.c.b16 %v712, %v712
    %v721 = vpack.c.b16 %v713, %v713
    %v722 = vpack.c.b16 %v714, %v714
    %v723 = vpack.c.b16 %v715, %v715
    %v724 = vpack.c.b16 %v716, %v716
    %v725 = vpack.c.b16 %v717, %v717
    %v862 = vunpack.c.l.b16 %v574
    %v863 = vunpack.c.l.b16 %v575
    %v864 = vunpack.c.l.b16 %v576
    %v865 = vunpack.c.l.b16 %v577
    %v866 = vunpack.c.l.b16 %v578
    %v867 = vunpack.c.l.b16 %v579
    %v868 = vunpack.c.l.b16 %v580
    %v869 = vunpack.c.l.b16 %v581
    %v870 = vunpack.c.l.b16 %v582
    %v871 = vunpack.c.l.b16 %v583
    %v872 = vunpack.c.l.b16 %v584
    %v873 = vunpack.c.l.b16 %v585
    %v874 = vunpack.c.l.b16 %v586
    %v875 = vunpack.c.l.b16 %v587
    %v876 = vunpack.c.l.b16 %v588
    %v877 = vunpack.c.l.b16 %v589
    %v878 = vunpack.c.l.b16 %v590
    %v879 = vunpack.c.l.b16 %v591
    %v880 = vunpack.c.l.b16 %v592
    %v881 = vunpack.c.l.b16 %v593
    %v882 = vunpack.c.l.b16 %v594
    %v883 = vunpack.c.l.b16 %v595
    %v884 = vunpack.c.l.b16 %v596
    %v885 = vunpack.c.l.b16 %v597
    %v886 = vunpack.c.l.b16 %v598
    %v887 = vunpack.c.l.b16 %v599
    %v888 = vunpack.c.l.b16 %v600
    %v889 = vunpack.c.l.b16 %v601
    %v890 = vunpack.c.l.b16 %v602
    %v891 = vunpack.c.l.b16 %v603
    %v892 = vunpack.c.l.b16 %v604
    %v893 = vunpack.c.l.b16 %v605
    %v894 = vunpack.c.l.b16 %v606
    %v895 = vunpack.c.l.b16 %v607
    %v896 = vunpack.c.l.b16 %v608
    %v897 = vunpack.c.l.b16 %v609
    %v898 = vunpack.c.l.b16 %v610
    %v899 = vunpack.c.l.b16 %v611
    %v900 = vunpack.c.l.b16 %v612
    %v901 = vunpack.c.l.b16 %v613
    %v902 = vunpack.c.l.b16 %v614
    %v903 = vunpack.c.l.b16 %v615
    %v904 = vunpack.c.l.b16 %v616
    %v905 = vunpack.c.l.b16 %v617
    %v906 = vunpack.c.l.b16 %v618
    %v907 = vunpack.c.l.b16 %v619
    %v908 = vunpack.c.l.b16 %v620
    %v909 = vunpack.c.l.b16 %v621
    %v910 = vunpack.c.l.b16 %v622
    %v911 = vunpack.c.l.b16 %v623
    %v912 = vunpack.c.l.b16 %v624
    %v913 = vunpack.c.l.b16 %v625
    %v914 = vunpack.c.l.b16 %v626
    %v915 = vunpack.c.l.b16 %v627
    %v916 = vunpack.c.l.b16 %v628
    %v917 = vunpack.c.l.b16 %v629
    %v918 = vunpack.c.l.b16 %v630
    %v919 = vunpack.c.l.b16 %v631
    %v920 = vunpack.c.l.b16 %v632
    %v921 = vunpack.c.l.b16 %v633
    %v922 = vunpack.c.l.b16 %v634
    %v923 = vunpack.c.l.b16 %v635
    %v924 = vunpack.c.l.b16 %v636
    %v925 = vunpack.c.l.b16 %v637
    %v926 = vunpack.c.l.b16 %v638
    %v927 = vunpack.c.l.b16 %v639
    %v928 = vunpack.c.l.b16 %v640
    %v929 = vunpack.c.l.b16 %v641
    %v930 = vunpack.c.l.b16 %v642
    %v931 = vunpack.c.l.b16 %v643
    %v932 = vunpack.c.l.b16 %v644
    %v933 = vunpack.c.l.b16 %v645
    %v934 = vunpack.c.l.b16 %v646
    %v935 = vunpack.c.l.b16 %v647
    %v936 = vunpack.c.l.b16 %v648
    %v937 = vunpack.c.l.b16 %v649
    %v938 = vunpack.c.l.b16 %v650
    %v939 = vunpack.c.l.b16 %v651
    %v940 = vunpack.c.l.b16 %v652
    %v941 = vunpack.c.l.b16 %v653
    %v942 = vunpack.c.l.b16 %v654
    %v943 = vunpack.c.l.b16 %v655
    %v944 = vunpack.c.l.b16 %v656
    %v945 = vunpack.c.l.b16 %v657
    %v946 = vunpack.c.l.b16 %v658
    %v947 = vunpack.c.l.b16 %v659
    %v948 = vunpack.c.l.b16 %v660
    %v949 = vunpack.c.l.b16 %v661
    %v950 = vunpack.c.l.b16 %v662
    %v951 = vunpack.c.l.b16 %v663
    %v952 = vunpack.c.l.b16 %v664
    %v953 = vunpack.c.l.b16 %v665
    %v954 = vunpack.c.l.b16 %v666
    %v955 = vunpack.c.l.b16 %v667
    %v956 = vunpack.c.l.b16 %v668
    %v957 = vunpack.c.l.b16 %v669
    %v958 = vunpack.c.l.b16 %v670
    %v959 = vunpack.c.l.b16 %v671
    %v960 = vunpack.c.l.b16 %v672
    %v961 = vunpack.c.l.b16 %v673
    %v962 = vunpack.c.l.b16 %v674
    %v963 = vunpack.c.l.b16 %v675
    %v964 = vunpack.c.l.b16 %v676
    %v965 = vunpack.c.l.b16 %v677
    %v966 = vunpack.c.l.b16 %v678
    %v967 = vunpack.c.l.b16 %v679
    %v968 = vunpack.c.l.b16 %v680
    %v969 = vunpack.c.l.b16 %v681
    %v970 = vunpack.c.l.b16 %v682
    %v971 = vunpack.c.l.b16 %v683
    %v972 = vunpack.c.l.b16 %v684
    %v973 = vunpack.c.l.b16 %v685
    %v974 = vunpack.c.l.b16 %v686
    %v975 = vunpack.c.l.b16 %v687
    %v976 = vunpack.c.l.b16 %v688
    %v977 = vunpack.c.l.b16 %v689
    %v978 = vunpack.c.l.b16 %v690
    %v979 = vunpack.c.l.b16 %v691
    %v980 = vunpack.c.l.b16 %v692
    %v981 = vunpack.c.l.b16 %v693
    %v982 = vunpack.c.l.b16 %v694
    %v983 = vunpack.c.l.b16 %v695
    %v984 = vunpack.c.l.b16 %v696
    %v985 = vunpack.c.l.b16 %v697
    %v986 = vunpack.c.l.b16 %v698
    %v987 = vunpack.c.l.b16 %v699
    %v988 = vunpack.c.l.b16 %v700
    %v989 = vunpack.c.l.b16 %v701
    %v990 = vpack.c.b16 %v863, %v862
    %v991 = vpack.c.b16 %v865, %v864
    %v992 = vpack.c.b16 %v867, %v866
    %v993 = vpack.c.b16 %v869, %v868
    %v994 = vpack.c.b16 %v871, %v870
    %v995 = vpack.c.b16 %v873, %v872
    %v996 = vpack.c.b16 %v875, %v874
    %v997 = vpack.c.b16 %v877, %v876
    %v998 = vpack.c.b16 %v879, %v878
    %v999 = vpack.c.b16 %v881, %v880
    %v1000 = vpack.c.b16 %v883, %v882
    %v1001 = vpack.c.b16 %v885, %v884
    %v1002 = vpack.c.b16 %v887, %v886
    %v1003 = vpack.c.b16 %v889, %v888
    %v1004 = vpack.c.b16 %v891, %v890
    %v1005 = vpack.c.b16 %v893, %v892
    %v1006 = vpack.c.b16 %v895, %v894
    %v1007 = vpack.c.b16 %v897, %v896
    %v1008 = vpack.c.b16 %v899, %v898
    %v1009 = vpack.c.b16 %v901, %v900
    %v1010 = vpack.c.b16 %v903, %v902
    %v1011 = vpack.c.b16 %v905, %v904
    %v1012 = vpack.c.b16 %v907, %v906
    %v1013 = vpack.c.b16 %v909, %v908
    %v1014 = vpack.c.b16 %v911, %v910
    %v1015 = vpack.c.b16 %v913, %v912
    %v1016 = vpack.c.b16 %v915, %v914
    %v1017 = vpack.c.b16 %v917, %v916
    %v1018 = vpack.c.b16 %v919, %v918
    %v1019 = vpack.c.b16 %v921, %v920
    %v1020 = vpack.c.b16 %v923, %v922
    %v1021 = vpack.c.b16 %v925, %v924
    %v1022 = vpack.c.b16 %v927, %v926
    %v1023 = vpack.c.b16 %v929, %v928
    %v1024 = vpack.c.b16 %v931, %v930
    %v1025 = vpack.c.b16 %v933, %v932
    %v1026 = vpack.c.b16 %v935, %v934
    %v1027 = vpack.c.b16 %v937, %v936
    %v1028 = vpack.c.b16 %v939, %v938
    %v1029 = vpack.c.b16 %v941, %v940
    %v1030 = vpack.c.b16 %v943, %v942
    %v1031 = vpack.c.b16 %v945, %v944
    %v1032 = vpack.c.b16 %v947, %v946
    %v1033 = vpack.c.b16 %v949, %v948
    %v1034 = vpack.c.b16 %v951, %v950
    %v1035 = vpack.c.b16 %v953, %v952
    %v1036 = vpack.c.b16 %v955, %v954
    %v1037 = vpack.c.b16 %v957, %v956
    %v1038 = vpack.c.b16 %v959, %v958
    %v1039 = vpack.c.b16 %v961, %v960
    %v1040 = vpack.c.b16 %v963, %v962
    %v1041 = vpack.c.b16 %v965, %v964
    %v1042 = vpack.c.b16 %v967, %v966
    %v1043 = vpack.c.b16 %v969, %v968
    %v1044 = vpack.c.b16 %v971, %v970
    %v1045 = vpack.c.b16 %v973, %v972
    %v1046 = vpack.c.b16 %v975, %v974
    %v1047 = vpack.c.b16 %v977, %v976
    %v1048 = vpack.c.b16 %v979, %v978
    %v1049 = vpack.c.b16 %v981, %v980
    %v1050 = vpack.c.b16 %v983, %v982
    %v1051 = vpack.c.b16 %v985, %v984
    %v1052 = vpack.c.b16 %v987, %v986
    %v1053 = vpack.c.b16 %v989, %v988
    %1118 = vmatpush.bf16.msra.mxu0 %v997
    %1119 = vmatpush.bf16.msra.mxu0 %v996
    %1120 = vmatpush.bf16.msra.mxu0 %v995
    %1121 = vmatpush.bf16.msra.mxu0 %v994
    %1122 = vmatpush.bf16.msra.mxu0 %v993
    %1123 = vmatpush.bf16.msra.mxu0 %v992
    %1124 = vmatpush.bf16.msra.mxu0 %v991
    %1125 = vmatpush.bf16.msra.mxu0 %v990
    %1126 = vmatmul.bf16.gmra.mxu0 %v718
    %v1127 = vpop.f32.mrf.mxu0
    %v1128 = vadd.f32 %v704, %v1127
    %v1129 = vpop.f32.mrf.mxu0
    %1130 = vdwg.mxu0
    %1131 = vmatpush.bf16.msra.mxu0 %v1005
    %1132 = vmatpush.bf16.msra.mxu0 %v1004
    %1133 = vmatpush.bf16.msra.mxu0 %v1003
    %1134 = vmatpush.bf16.msra.mxu0 %v1002
    %1135 = vmatpush.bf16.msra.mxu0 %v1001
    %1136 = vmatpush.bf16.msra.mxu0 %v1000
    %1137 = vmatpush.bf16.msra.mxu0 %v999
    %1138 = vmatpush.bf16.msra.mxu0 %v998
    %1139 = vmatmul.bf16.gmra.mxu0 %v719
    %v1140 = vpop.f32.mrf.mxu0
    %v1141 = vadd.f32 %v1128, %v1140
    %v1142 = vpop.f32.mrf.mxu0
    %1143 = vdwg.mxu0
    %1144 = vmatpush.bf16.msra.mxu0 %v1013
    %1145 = vmatpush.bf16.msra.mxu0 %v1012
    %1146 = vmatpush.bf16.msra.mxu0 %v1011
    %1147 = vmatpush.bf16.msra.mxu0 %v1010
    %1148 = vmatpush.bf16.msra.mxu0 %v1009
    %1149 = vmatpush.bf16.msra.mxu0 %v1008
    %1150 = vmatpush.bf16.msra.mxu0 %v1007
    %1151 = vmatpush.bf16.msra.mxu0 %v1006
    %1152 = vmatmul.bf16.gmra.mxu0 %v720
    %v1153 = vpop.f32.mrf.mxu0
    %v1154 = vadd.f32 %v1141, %v1153
    %v1155 = vpop.f32.mrf.mxu0
    %1156 = vdwg.mxu0
    %1157 = vmatpush.bf16.msra.mxu0 %v1021
    %1158 = vmatpush.bf16.msra.mxu0 %v1020
    %1159 = vmatpush.bf16.msra.mxu0 %v1019
    %1160 = vmatpush.bf16.msra.mxu0 %v1018
    %1161 = vmatpush.bf16.msra.mxu0 %v1017
    %1162 = vmatpush.bf16.msra.mxu0 %v1016
    %1163 = vmatpush.bf16.msra.mxu0 %v1015
    %1164 = vmatpush.bf16.msra.mxu0 %v1014
    %1165 = vmatmul.bf16.gmra.mxu0 %v721
    %v1166 = vpop.f32.mrf.mxu0
    %v1167 = vadd.f32 %v1154, %v1166
    %v1168 = vpop.f32.mrf.mxu0
    %1169 = vdwg.mxu0
    %1170 = vmatpush.bf16.msra.mxu0 %v1029
    %1171 = vmatpush.bf16.msra.mxu0 %v1028
    %1172 = vmatpush.bf16.msra.mxu0 %v1027
    %1173 = vmatpush.bf16.msra.mxu0 %v1026
    %1174 = vmatpush.bf16.msra.mxu0 %v1025
    %1175 = vmatpush.bf16.msra.mxu0 %v1024
    %1176 = vmatpush.bf16.msra.mxu0 %v1023
    %1177 = vmatpush.bf16.msra.mxu0 %v1022
    %1178 = vmatmul.bf16.gmra.mxu0 %v722
    %v1179 = vpop.f32.mrf.mxu0
    %v1180 = vadd.f32 %v1167, %v1179
    %v1181 = vpop.f32.mrf.mxu0
    %1182 = vdwg.mxu0
    %1183 = vmatpush.bf16.msra.mxu0 %v1037
    %1184 = vmatpush.bf16.msra.mxu0 %v1036
    %1185 = vmatpush.bf16.msra.mxu0 %v1035
    %1186 = vmatpush.bf16.msra.mxu0 %v1034
    %1187 = vmatpush.bf16.msra.mxu0 %v1033
    %1188 = vmatpush.bf16.msra.mxu0 %v1032
    %1189 = vmatpush.bf16.msra.mxu0 %v1031
    %1190 = vmatpush.bf16.msra.mxu0 %v1030
    %1191 = vmatmul.bf16.gmra.mxu0 %v723
    %v1192 = vpop.f32.mrf.mxu0
    %v1193 = vadd.f32 %v1180, %v1192
    %v1194 = vpop.f32.mrf.mxu0
    %1195 = vdwg.mxu0
    %1196 = vmatpush.bf16.msra.mxu0 %v1045
    %1197 = vmatpush.bf16.msra.mxu0 %v1044
    %1198 = vmatpush.bf16.msra.mxu0 %v1043
    %1199 = vmatpush.bf16.msra.mxu0 %v1042
    %1200 = vmatpush.bf16.msra.mxu0 %v1041
    %1201 = vmatpush.bf16.msra.mxu0 %v1040
    %1202 = vmatpush.bf16.msra.mxu0 %v1039
    %1203 = vmatpush.bf16.msra.mxu0 %v1038
    %1204 = vmatmul.bf16.gmra.mxu0 %v724
    %v1205 = vpop.f32.mrf.mxu0
    %v1206 = vadd.f32 %v1193, %v1205
    %v1207 = vpop.f32.mrf.mxu0
    %1208 = vdwg.mxu0
    %1209 = vmatpush.bf16.msra.mxu0 %v1053
    %1210 = vmatpush.bf16.msra.mxu0 %v1052
    %1211 = vmatpush.bf16.msra.mxu0 %v1051
    %1212 = vmatpush.bf16.msra.mxu0 %v1050
    %1213 = vmatpush.bf16.msra.mxu0 %v1049
    %1214 = vmatpush.bf16.msra.mxu0 %v1048
    %1215 = vmatpush.bf16.msra.mxu0 %v1047
    %1216 = vmatpush.bf16.msra.mxu0 %v1046
    %1217 = vmatmul.bf16.gmra.mxu0 %v725
    %v1218 = vpop.f32.mrf.mxu0
    %v1219 = vadd.f32 %v1206, %v1218
    %v1220 = vpop.f32.mrf.mxu0
    %1221 = vdwg.mxu0
    %v1222 = vmax.f32 %v1219, 0.0
    %v1223 = vpack.c.bf16 %v569, %v569
    %v1224 = vld [vmem:[%s6] sm:$0xf]
    %v1225 = vld [vmem:[%s6 + $0x4] sm:$0xf]
    %v1226 = vld [vmem:[%s6 + $0x8] sm:$0xf]
    %v1227 = vld [vmem:[%s6 + $0xc] sm:$0xf]
    %v1228 = vld [vmem:[%s6 + $0x10] sm:$0xf]
    %v1229 = vld [vmem:[%s6 + $0x14] sm:$0xf]
    %v1230 = vld [vmem:[%s6 + $0x18] sm:$0xf]
    %v1231 = vld [vmem:[%s6 + $0x1c] sm:$0xf]
    %v1232 = vld [vmem:[%s6 + $0x20] sm:$0xf]
    %v1233 = vld [vmem:[%s6 + $0x24] sm:$0xf]
    %v1234 = vld [vmem:[%s6 + $0x28] sm:$0xf]
    %v1235 = vld [vmem:[%s6 + $0x2c] sm:$0xf]
    %v1236 = vld [vmem:[%s6 + $0x30] sm:$0xf]
    %v1237 = vld [vmem:[%s6 + $0x34] sm:$0xf]
    %v1238 = vld [vmem:[%s6 + $0x38] sm:$0xf]
    %v1239 = vld [vmem:[%s6 + $0x3c] sm:$0xf]
    %v1240 = vpack.c.bf16 %v1222, %v1222
    %v1241 = vld [vmem:[#allocation6] sm:$0xf]
    %v1242 = vld [vmem:[#allocation6 + $0x4] sm:$0xf]
    %v1243 = vld [vmem:[#allocation6 + $0x8] sm:$0xf]
    %v1244 = vld [vmem:[#allocation6 + $0xc] sm:$0xf]
    %v1245 = vld [vmem:[#allocation6 + $0x10] sm:$0xf]
    %v1246 = vld [vmem:[#allocation6 + $0x14] sm:$0xf]
    %v1247 = vld [vmem:[#allocation6 + $0x18] sm:$0xf]
    %v1248 = vld [vmem:[#allocation6 + $0x1c] sm:$0xf]
    %v1249 = vld [vmem:[#allocation6 + $0x20] sm:$0xf]
    %v1250 = vld [vmem:[#allocation6 + $0x24] sm:$0xf]
    %v1251 = vld [vmem:[#allocation6 + $0x28] sm:$0xf]
    %v1252 = vld [vmem:[#allocation6 + $0x2c] sm:$0xf]
    %v1253 = vld [vmem:[#allocation6 + $0x30] sm:$0xf]
    %v1254 = vld [vmem:[#allocation6 + $0x34] sm:$0xf]
    %v1255 = vld [vmem:[#allocation6 + $0x38] sm:$0xf]
    %v1256 = vld [vmem:[#allocation6 + $0x3c] sm:$0xf]
    %v1273 = vunpack.c.l.b16 %v1241
    %v1274 = vunpack.c.l.b16 %v1242
    %v1275 = vunpack.c.l.b16 %v1243
    %v1276 = vunpack.c.l.b16 %v1244
    %v1277 = vunpack.c.l.b16 %v1245
    %v1278 = vunpack.c.l.b16 %v1246
    %v1279 = vunpack.c.l.b16 %v1247
    %v1280 = vunpack.c.l.b16 %v1248
    %v1281 = vunpack.c.l.b16 %v1249
    %v1282 = vunpack.c.l.b16 %v1250
    %v1283 = vunpack.c.l.b16 %v1251
    %v1284 = vunpack.c.l.b16 %v1252
    %v1285 = vunpack.c.l.b16 %v1253
    %v1286 = vunpack.c.l.b16 %v1254
    %v1287 = vunpack.c.l.b16 %v1255
    %v1288 = vunpack.c.l.b16 %v1256
    %v1289 = vpack.c.b16 %v1274, %v1273
    %v1290 = vpack.c.b16 %v1276, %v1275
    %v1291 = vpack.c.b16 %v1278, %v1277
    %v1292 = vpack.c.b16 %v1280, %v1279
    %v1293 = vpack.c.b16 %v1282, %v1281
    %v1294 = vpack.c.b16 %v1284, %v1283
    %v1295 = vpack.c.b16 %v1286, %v1285
    %v1296 = vpack.c.b16 %v1288, %v1287
    %1305 = vmatpush.bf16.msra.mxu0 %v1296
    %1306 = vmatpush.bf16.msra.mxu0 %v1295
    %1307 = vmatpush.bf16.msra.mxu0 %v1294
    %1308 = vmatpush.bf16.msra.mxu0 %v1293
    %1309 = vmatpush.bf16.msra.mxu0 %v1292
    %1310 = vmatpush.bf16.msra.mxu0 %v1291
    %1311 = vmatpush.bf16.msra.mxu0 %v1290
    %1312 = vmatpush.bf16.msra.mxu0 %v1289
    %1313 = vmatmul.bf16.gmra.mxu0 %v1240
    %v1314 = vpop.f32.mrf.mxu0
    %v1315 = vadd.f32 0.0, %v1314
    %v1316 = vpop.f32.mrf.mxu0
    %1317 = vdwg.mxu0
    %v1334 = vunpack.c.l.b16 %v1224
    %v1335 = vunpack.c.l.b16 %v1225
    %v1336 = vunpack.c.l.b16 %v1226
    %v1337 = vunpack.c.l.b16 %v1227
    %v1338 = vunpack.c.l.b16 %v1228
    %v1339 = vunpack.c.l.b16 %v1229
    %v1340 = vunpack.c.l.b16 %v1230
    %v1341 = vunpack.c.l.b16 %v1231
    %v1342 = vunpack.c.l.b16 %v1232
    %v1343 = vunpack.c.l.b16 %v1233
    %v1344 = vunpack.c.l.b16 %v1234
    %v1345 = vunpack.c.l.b16 %v1235
    %v1346 = vunpack.c.l.b16 %v1236
    %v1347 = vunpack.c.l.b16 %v1237
    %v1348 = vunpack.c.l.b16 %v1238
    %v1349 = vunpack.c.l.b16 %v1239
    %v1350 = vpack.c.b16 %v1335, %v1334
    %v1351 = vpack.c.b16 %v1337, %v1336
    %v1352 = vpack.c.b16 %v1339, %v1338
    %v1353 = vpack.c.b16 %v1341, %v1340
    %v1354 = vpack.c.b16 %v1343, %v1342
    %v1355 = vpack.c.b16 %v1345, %v1344
    %v1356 = vpack.c.b16 %v1347, %v1346
    %v1357 = vpack.c.b16 %v1349, %v1348
    %1366 = vmatpush.bf16.msra.mxu0 %v1357
    %1367 = vmatpush.bf16.msra.mxu0 %v1356
    %1368 = vmatpush.bf16.msra.mxu0 %v1355
    %1369 = vmatpush.bf16.msra.mxu0 %v1354
    %1370 = vmatpush.bf16.msra.mxu0 %v1353
    %1371 = vmatpush.bf16.msra.mxu0 %v1352
    %1372 = vmatpush.bf16.msra.mxu0 %v1351
    %1373 = vmatpush.bf16.msra.mxu0 %v1350
    %1374 = vmatmul.bf16.gmra.mxu0 %v1223
    %v1375 = vpop.f32.mrf.mxu0
    %v1376 = vadd.f32 %v1315, %v1375
    %v1377 = vpop.f32.mrf.mxu0
    %1378 = vdwg.mxu0
    %v1379 = vld [vmem:[%s8] sm:$0x1]
    %v1381 = vperm.slane %v1379, 0
    %v1383 = vadd.f32 %v1376, %v1381
    %1384 = vst [vmem:[%s9] sm:$0xff] %v1383
    // Predicated region
    $region50: #{simple_model_head.1} parent=1 // pred_check
      _
    $region51: #{simple_model_head.1} parent=1 // pred_check_branch
      %1386 = sbr.rel (0) target = $region53
    $region52: #{simple_model_head.1} parent=1 // pred_region
      _
    $region53: #{simple_model_head.1} parent=1 // pred_fallthru
      _
    // Predicated region
    $region54: #{simple_model_head.1} parent=1 // pred_check
      _
    $region55: #{simple_model_head.1} parent=1 // pred_check_branch
      %1388 = sbr.rel (0) target = $region57
    $region56: #{simple_model_head.1} parent=1 // pred_region
      _
    $region57: #{simple_model_head.1} parent=1 // pred_fallthru
      _
    %1389 = vsyncpa [#allocation3], 1
    %1390 = vsyncpa [#allocation5], 1

</llo_original>
